<compile_context>
chip_gen: v7x
topology: tpu7x:2x2x1
jax: 0.10.0
libtpu: 0.0.40
codegen_flags: <defaults>
</compile_context>

<pallas_src>
import jax
import jax.numpy as jnp
from jax.experimental import pallas as pl
from jax.experimental.pallas import tpu as pltpu

INPUT_DIM = 768
HIDDEN_DIM = 128
OUTPUT_DIM = 64


def _mlp_kernel(x_ref, w1_ref, b1_ref, w2_ref, b2_ref, o_ref):
    # Stream x as f32 and downcast in VMEM: a cheap VPU pack that hides under
    # the next tile's DMA, and avoids an extra HBM pass in the wrapper.
    x = x_ref[...].astype(jnp.bfloat16)
    # First linear: bf16 operands, f32 accumulation on the MXU.
    h = jnp.dot(x, w1_ref[...], preferred_element_type=jnp.float32)
    h = jnp.maximum(h + b1_ref[...], 0.0)                 # bias + ReLU in f32 (VPU)
    # Second linear: downcast the activation to bf16 to match the weight dtype.
    y = jnp.dot(h.astype(w2_ref.dtype), w2_ref[...],
                preferred_element_type=jnp.float32)
    o_ref[...] = (y + b2_ref[...]).astype(o_ref.dtype)


def prepare_text_encoder_params(w1_pt, b1, w2_pt, b2):
    """One-time conversion of PyTorch-layout params into kernel layout.

    w1_pt: (hidden, in), b1: (hidden,), w2_pt: (out, hidden), b2: (out,).
    Weights are transposed to (in, out), cast to bf16, and the output dim is
    padded to a multiple of 128 lanes. Call once; reuse across forwards.
    """
    d_hid, _ = w1_pt.shape
    d_out = w2_pt.shape[0]
    d_out_p = max(128, pl.cdiv(d_out, 128) * 128)

    w1 = jnp.asarray(w1_pt, jnp.float32).T.astype(jnp.bfloat16)      # (in, hid)
    w2 = jnp.asarray(w2_pt, jnp.float32).T                           # (hid, out)
    if d_out_p != d_out:
        w2 = jnp.pad(w2, ((0, 0), (0, d_out_p - d_out)))
    w2 = w2.astype(jnp.bfloat16)                                     # (hid, out_p)

    b1_2d = jnp.asarray(b1, jnp.float32).reshape(1, d_hid)
    b2_2d = jnp.pad(jnp.asarray(b2, jnp.float32),
                    (0, d_out_p - d_out)).reshape(1, d_out_p)
    return dict(w1=w1, b1=b1_2d, w2=w2, b2=b2_2d, d_out=d_out)


def _choose_tb(B, cap=512):
    """Batch tile: multiple of 16 (bf16 packs 16 sublanes/vreg), capped at 512
    (per-step DMA >> per-step overhead), and picked so the grid has an even
    number (>=2) of steps so v7x's two TensorCores get equal shards."""
    if B <= 32:
        return B                         # single step; block equals full batch dim
    grid = max(2, pl.cdiv(B, cap))
    if grid % 2:
        grid += 1                        # even grid for v7x 2-TC sharding
    tb = pl.cdiv(B, grid)
    tb = ((tb + 15) // 16) * 16          # multiple of 16 for bf16 sublane packing
    return min(tb, cap)


def text_encoder_forward(x, params, *, tb=None):
    """x: (B, input_dim) f32; params from prepare_text_encoder_params().
       Returns (B, output_dim) f32."""
    B, d_in = x.shape
    w1, b1, w2, b2 = params["w1"], params["b1"], params["w2"], params["b2"]
    d_hid = w1.shape[1]
    d_out_p = w2.shape[1]
    d_out = params["d_out"]

    if tb is None:
        tb = _choose_tb(B)
    grid_b = pl.cdiv(B, tb)   # ragged last tile handled by Pallas (no jnp.pad copy)

    x = x.astype(jnp.float32)

    # ---- VMEM budget (double-buffered tiles + resident weights) --------------
    vmem_bytes = (
        2 * tb * d_in * 4                              # x tiles (f32) x2
        + 2 * tb * d_out_p * 4                         # out tiles (f32) x2
        + 2 * (d_in * d_hid + d_hid * d_out_p) * 2     # W1 + W2 (bf16) x2
        + 2 * 2 * 8 * 128 * 4                          # biases (f32, padded rows)
        + tb * d_in * 2                                # in-kernel bf16 copy of x
        + tb * d_hid * 4                               # h intermediate (f32)
    )
    vmem_limit = int(min(96 << 20, max(32 << 20, 2 * vmem_bytes)))

    cost = pl.CostEstimate(
        flops=2 * B * (d_in * d_hid + d_hid * d_out_p),
        transcendentals=0,
        bytes_accessed=(B * d_in * 4                           # x streamed as f32
                        + (d_in * d_hid + d_hid * d_out_p) * 2  # bf16 weights
                        + (d_hid + d_out_p) * 4                 # biases
                        + B * d_out_p * 4),                     # padded f32 output
    )

    out = pl.pallas_call(
        _mlp_kernel,
        out_shape=jax.ShapeDtypeStruct((B, d_out_p), jnp.float32),
        grid_spec=pl.GridSpec(
            grid=(grid_b,),
            in_specs=[
                pl.BlockSpec((tb, d_in), lambda i: (i, 0)),         # x tile (streamed)
                pl.BlockSpec((d_in, d_hid), lambda i: (0, 0)),      # W1 (resident)
                pl.BlockSpec((1, d_hid), lambda i: (0, 0)),         # b1
                pl.BlockSpec((d_hid, d_out_p), lambda i: (0, 0)),   # W2 (resident, lane-padded)
                pl.BlockSpec((1, d_out_p), lambda i: (0, 0)),       # b2 (lane-padded)
            ],
            out_specs=pl.BlockSpec((tb, d_out_p), lambda i: (i, 0)),
        ),
        compiler_params=pltpu.CompilerParams(
            dimension_semantics=("parallel",),
            vmem_limit_bytes=vmem_limit,
        ),
        cost_estimate=cost,
    )(x, w1, b1, w2, b2)

    # Drop the 64->128 output-lane padding outside the kernel; under jit this
    # slice fuses with the consumer.
    return out[:, :d_out]


if __name__ == "__main__":
    input_dim, hidden_dim, output_dim = INPUT_DIM, HIDDEN_DIM, OUTPUT_DIM
    batch = 8

    key = jax.random.PRNGKey(0)
    kx, kw1, kb1, kw2, kb2 = jax.random.split(key, 5)

    # Deterministic synthetic parameters in PyTorch nn.Linear layout:
    # weight (out, in), bias (out,).
    w1_pt = jax.random.normal(kw1, (hidden_dim, input_dim), jnp.float32) * 0.02
    b1 = jax.random.normal(kb1, (hidden_dim,), jnp.float32) * 0.02
    w2_pt = jax.random.normal(kw2, (output_dim, hidden_dim), jnp.float32) * 0.02
    b2 = jax.random.normal(kb2, (output_dim,), jnp.float32) * 0.02

    x = jax.random.normal(kx, (batch, input_dim), jnp.float32)

    # One-time param conversion (hoisted out of the per-forward path).
    params = prepare_text_encoder_params(w1_pt, b1, w2_pt, b2)

    out = text_encoder_forward(x, params)
    out = jax.block_until_ready(out)

    # Reference: plain f32 forward. The kernel uses bf16 MXU operands with f32
    # accumulation, so compare with a tolerance covering bf16 rounding.
    ref = jnp.maximum(x @ w1_pt.T + b1, 0.0) @ w2_pt.T + b2
    assert out.shape == (batch, output_dim)
    assert jnp.allclose(out, ref, atol=3e-2, rtol=3e-2)

    print("KERNEL_OK")
</pallas_src>

<mosaic_0001>
module attributes {stable_mosaic.version = 11 : i64} {
  func.func @_mlp_kernel(%arg0: i32, %arg1: memref<8x768xf32, #tpu.memory_space<vmem>>, %arg2: memref<768x128xbf16, #tpu.memory_space<vmem>>, %arg3: memref<1x128xf32, #tpu.memory_space<vmem>>, %arg4: memref<128x128xbf16, #tpu.memory_space<vmem>>, %arg5: memref<1x128xf32, #tpu.memory_space<vmem>>, %arg6: memref<8x128xf32, #tpu.memory_space<vmem>>) attributes {dimension_semantics = [#tpu.dimension_semantics<parallel>], iteration_bounds = array<i64: 1>, scalar_prefetch = 0 : i64, scratch_operands = 0 : i64, tpu.core_type = #tpu.core_type<tc>, window_params = [{transform_indices = @transform_0, window_bounds = array<i64: 8, 768>}, {pipeline_mode = #tpu.pipeline_mode<synchronous>, transform_indices = @transform_1, window_bounds = array<i64: 768, 128>}, {pipeline_mode = #tpu.pipeline_mode<synchronous>, transform_indices = @transform_2, window_bounds = array<i64: 1, 128>}, {pipeline_mode = #tpu.pipeline_mode<synchronous>, transform_indices = @transform_3, window_bounds = array<i64: 128, 128>}, {pipeline_mode = #tpu.pipeline_mode<synchronous>, transform_indices = @transform_4, window_bounds = array<i64: 1, 128>}, {transform_indices = @transform_5, window_bounds = array<i64: 8, 128>}]} {
    %c0 = arith.constant 0 : index
    %c0_0 = arith.constant 0 : index
    %0 = vector.load %arg1[%c0, %c0_0] : memref<8x768xf32, #tpu.memory_space<vmem>>, vector<8x768xf32>
    %1 = arith.truncf %0 : vector<8x768xf32> to vector<8x768xbf16>
    %c0_1 = arith.constant 0 : index
    %c0_2 = arith.constant 0 : index
    %2 = vector.load %arg2[%c0_1, %c0_2] : memref<768x128xbf16, #tpu.memory_space<vmem>>, vector<768x128xbf16>
    %cst = arith.constant dense<0.000000e+00> : vector<8x128xf32>
    %3 = tpu.matmul %1, %2, %cst {dimension_numbers = #tpu.dot_dimension_numbers<[1], [0], [0], [1], [0, 0, 1, 1], [], []>} : vector<8x768xbf16>, vector<768x128xbf16>, vector<8x128xf32> -> vector<8x128xf32>
    %c0_3 = arith.constant 0 : index
    %c0_4 = arith.constant 0 : index
    %4 = vector.load %arg3[%c0_3, %c0_4] : memref<1x128xf32, #tpu.memory_space<vmem>>, vector<1x128xf32>
    %5 = vector.broadcast %4 : vector<1x128xf32> to vector<8x128xf32>
    %6 = arith.addf %3, %5 : vector<8x128xf32>
    %cst_5 = arith.constant 0.000000e+00 : f32
    %7 = vector.broadcast %cst_5 : f32 to vector<8x128xf32>
    %8 = arith.maximumf %6, %7 : vector<8x128xf32>
    %9 = arith.truncf %8 : vector<8x128xf32> to vector<8x128xbf16>
    %c0_6 = arith.constant 0 : index
    %c0_7 = arith.constant 0 : index
    %10 = vector.load %arg4[%c0_6, %c0_7] : memref<128x128xbf16, #tpu.memory_space<vmem>>, vector<128x128xbf16>
    %cst_8 = arith.constant dense<0.000000e+00> : vector<8x128xf32>
    %11 = tpu.matmul %9, %10, %cst_8 {dimension_numbers = #tpu.dot_dimension_numbers<[1], [0], [0], [1], [0, 0, 1, 1], [], []>} : vector<8x128xbf16>, vector<128x128xbf16>, vector<8x128xf32> -> vector<8x128xf32>
    %c0_9 = arith.constant 0 : index
    %c0_10 = arith.constant 0 : index
    %12 = vector.load %arg5[%c0_9, %c0_10] : memref<1x128xf32, #tpu.memory_space<vmem>>, vector<1x128xf32>
    %13 = vector.broadcast %12 : vector<1x128xf32> to vector<8x128xf32>
    %14 = arith.addf %11, %13 : vector<8x128xf32>
    %c0_11 = arith.constant 0 : index
    %c0_12 = arith.constant 0 : index
    %15 = vector.load %arg6[%c0_11, %c0_12] : memref<8x128xf32, #tpu.memory_space<vmem>>, vector<8x128xf32>
    tpu.vector_store %arg6[%c0_11, %c0_12], %14 {strides = array<i32>} : memref<8x128xf32, #tpu.memory_space<vmem>>, vector<8x128xf32>,
    return
  }
  func.func @transform_0(%arg0: i32) -> (i32, i32) {
    %c0_i32 = arith.constant 0 : i32
    %c0_i32_0 = arith.constant 0 : i32
    return %arg0, %c0_i32 : i32, i32
  }
  func.func @transform_1(%arg0: i32) -> (i32, i32) {
    %c0_i32 = arith.constant 0 : i32
    %c0_i32_0 = arith.constant 0 : i32
    %c0_i32_1 = arith.constant 0 : i32
    return %c0_i32, %c0_i32_0 : i32, i32
  }
  func.func @transform_2(%arg0: i32) -> (i32, i32) {
    %c0_i32 = arith.constant 0 : i32
    %c0_i32_0 = arith.constant 0 : i32
    %c0_i32_1 = arith.constant 0 : i32
    return %c0_i32, %c0_i32_0 : i32, i32
  }
  func.func @transform_3(%arg0: i32) -> (i32, i32) {
    %c0_i32 = arith.constant 0 : i32
    %c0_i32_0 = arith.constant 0 : i32
    %c0_i32_1 = arith.constant 0 : i32
    return %c0_i32, %c0_i32_0 : i32, i32
  }
  func.func @transform_4(%arg0: i32) -> (i32, i32) {
    %c0_i32 = arith.constant 0 : i32
    %c0_i32_0 = arith.constant 0 : i32
    %c0_i32_1 = arith.constant 0 : i32
    return %c0_i32, %c0_i32_0 : i32, i32
  }
  func.func @transform_5(%arg0: i32) -> (i32, i32) {
    %c0_i32 = arith.constant 0 : i32
    %c0_i32_0 = arith.constant 0 : i32
    return %arg0, %c0_i32 : i32, i32
  }
}

</mosaic_0001>

<llo_original>
// kernel: tpu_custom_call.1
$region0: #{tpu_custom_call.1}
  #allocation0 [shape = 'u32[]', space=smem, size = 0x4, offset = 0x4, fixed_abs, tag = 'smem constant byte address 0x4 - core index']
  #allocation1 [shape = 'u32[144,128]{1,0:T(1,128)}', space=vmem, size = 0x12000, scoped, tag = 'internal scratch']
  %s0 = inlined_call_operand.hbm [shape: f32[8,768], index: 0, kind: input, shape index: {}]
  %s1 = inlined_call_operand.hbm [shape: bf16[768,128], index: 1, kind: input, shape index: {}]
  %s2 = inlined_call_operand.vmem [shape: f32[1,128], index: 2, kind: input, shape index: {}]
  %s3 = inlined_call_operand.hbm [shape: bf16[128,128], index: 3, kind: input, shape index: {}]
  %s4 = inlined_call_operand.vmem [shape: f32[1,128], index: 4, kind: input, shape index: {}]
  %s5 = inlined_call_operand.hbm [shape: f32[8,128], index: 5, kind: output, shape index: {}]
  %s6 = sld [smem:[#allocation0]]
  $region42: #{tpu_custom_call.1} parent=0
    _
  %s8 = ssub.s32 1, %s6
  %s9 = scalar_select 0, %s8, %s6
  $region1: #{tpu_custom_call.1} parent=0
    #allocation2 [shape = 'u8[24576]{0}', space=vmem, size = 0x6000, scoped, tag = 'input window, operand 0, single buffered']
    #allocation3 [shape = 's32[1]{0}', space=sflag, size = 0x4, scoped, tag = 'scoped memory for tpu_custom_call.1']
    #allocation4 [shape = 's32[1]{0}', space=sflag, size = 0x4, scoped, tag = 'scoped memory for tpu_custom_call.1']
    #allocation5 [shape = 'u8[196608]{0}', space=vmem, size = 0x30000, scoped, tag = 'input window, operand 1, single buffered']
    #allocation6 [shape = 's32[1]{0}', space=sflag, size = 0x4, scoped, tag = 'scoped memory for tpu_custom_call.1']
    #allocation7 [shape = 'u8[32768]{0}', space=vmem, size = 0x8000, scoped, tag = 'input window, operand 3, single buffered']
    #allocation8 [shape = 'u8[4096]{0}', space=vmem, size = 0x1000, scoped, tag = 'output window, operand 0, single buffered']
    %10 = vsyncpa [#allocation3], 0
    %11 = vsyncpa [#allocation6], 0
    %12 = vsyncpa [#allocation4], 0
    // Predicated region
    $region2: #{tpu_custom_call.1} parent=1 // pred_check
      _
    $region3: #{tpu_custom_call.1} parent=1 // pred_check_branch
      %14 = sbr.rel (0) target = $region5
    $region4: #{tpu_custom_call.1} parent=1 // pred_region
      %s16 = ssub.s32 768, 768
      %17 = vsyncadd [#allocation3], %s16
      %s19 = sshll.u32 [#allocation2], 4
      %s20 = int_to_ptr.vmem [resolvable:$true] %s19
      %22 = dma.hbm_to_vmem [thread:$0]  %s0, 768, %s20, [#allocation3]
    $region5: #{tpu_custom_call.1} parent=1 // pred_fallthru
      _
    // Predicated region
    $region6: #{tpu_custom_call.1} parent=1 // pred_check
      _
    $region7: #{tpu_custom_call.1} parent=1 // pred_check_branch
      %24 = sbr.rel (0) target = $region9
    $region8: #{tpu_custom_call.1} parent=1 // pred_region
      %s26 = ssub.s32 6144, 6144
      %27 = vsyncadd [#allocation6], %s26
      %s28 = sshll.u32 [#allocation5], 4
      %s29 = int_to_ptr.vmem [resolvable:$true] %s28
      %34 = dma.hbm_to_vmem [thread:$0]  %s1, 6144, %s29, [#allocation6], 64, 64, 4
    $region9: #{tpu_custom_call.1} parent=1 // pred_fallthru
      _
    // Predicated region
    $region10: #{tpu_custom_call.1} parent=1 // pred_check
      _
    $region11: #{tpu_custom_call.1} parent=1 // pred_check_branch
      %36 = sbr.rel (0) target = $region13
    $region12: #{tpu_custom_call.1} parent=1 // pred_region
      _
    $region13: #{tpu_custom_call.1} parent=1 // pred_fallthru
      _
    // Predicated region
    $region14: #{tpu_custom_call.1} parent=1 // pred_check
      _
    $region15: #{tpu_custom_call.1} parent=1 // pred_check_branch
      %38 = sbr.rel (0) target = $region17
    $region16: #{tpu_custom_call.1} parent=1 // pred_region
      %s40 = ssub.s32 1024, 1024
      %41 = vsyncadd [#allocation6], %s40
      %s42 = sshll.u32 [#allocation7], 4
      %s43 = int_to_ptr.vmem [resolvable:$true] %s42
      %48 = dma.hbm_to_vmem [thread:$0]  %s3, 1024, %s43, [#allocation6], 64, 64, 4
    $region17: #{tpu_custom_call.1} parent=1 // pred_fallthru
      _
    // Predicated region
    $region18: #{tpu_custom_call.1} parent=1 // pred_check
      _
    $region19: #{tpu_custom_call.1} parent=1 // pred_check_branch
      %50 = sbr.rel (0) target = $region21
    $region20: #{tpu_custom_call.1} parent=1 // pred_region
      _
    $region21: #{tpu_custom_call.1} parent=1 // pred_fallthru
      _
    // Predicated region
    $region22: #{tpu_custom_call.1} parent=1 // pred_check
      _
    $region23: #{tpu_custom_call.1} parent=1 // pred_check_branch
      %52 = sbr.rel (0) target = $region25
    $region24: #{tpu_custom_call.1} parent=1 // pred_region
      %53 = dma.done [#allocation3], 768
    $region25: #{tpu_custom_call.1} parent=1 // pred_fallthru
      _
    // Predicated region
    $region26: #{tpu_custom_call.1} parent=1 // pred_check
      _
    $region27: #{tpu_custom_call.1} parent=1 // pred_check_branch
      %55 = sbr.rel (0) target = $region29
    $region28: #{tpu_custom_call.1} parent=1 // pred_region
      %56 = dma.done [#allocation6], 6144
    $region29: #{tpu_custom_call.1} parent=1 // pred_fallthru
      _
    // Predicated region
    $region30: #{tpu_custom_call.1} parent=1 // pred_check
      _
    $region31: #{tpu_custom_call.1} parent=1 // pred_check_branch
      %58 = sbr.rel (0) target = $region33
    $region32: #{tpu_custom_call.1} parent=1 // pred_region
      %59 = dma.done [#allocation6], 1024
    $region33: #{tpu_custom_call.1} parent=1 // pred_fallthru
      _
    %v61 = vld [vmem:[#allocation2] sm:$0xff]
    %v62 = vld [vmem:[#allocation2 + $0x8] sm:$0xff]
    %v63 = vld [vmem:[#allocation2 + $0x10] sm:$0xff]
    %v64 = vld [vmem:[#allocation2 + $0x18] sm:$0xff]
    %v65 = vld [vmem:[#allocation2 + $0x20] sm:$0xff]
    %v66 = vld [vmem:[#allocation2 + $0x28] sm:$0xff]
    %v67 = vpack.c.bf16 %v61, %v61
    %v68 = vpack.c.bf16 %v62, %v62
    %v69 = vpack.c.bf16 %v63, %v63
    %v70 = vpack.c.bf16 %v64, %v64
    %v71 = vpack.c.bf16 %v65, %v65
    %v72 = vpack.c.bf16 %v66, %v66
    %v73 = vld [vmem:[#allocation5] sm:$0xf]
    %v74 = vld [vmem:[#allocation5 + $0x4] sm:$0xf]
    %v75 = vld [vmem:[#allocation5 + $0x8] sm:$0xf]
    %v76 = vld [vmem:[#allocation5 + $0xc] sm:$0xf]
    %v77 = vld [vmem:[#allocation5 + $0x10] sm:$0xf]
    %v78 = vld [vmem:[#allocation5 + $0x14] sm:$0xf]
    %v79 = vld [vmem:[#allocation5 + $0x18] sm:$0xf]
    %v80 = vld [vmem:[#allocation5 + $0x1c] sm:$0xf]
    %v81 = vld [vmem:[#allocation5 + $0x20] sm:$0xf]
    %v82 = vld [vmem:[#allocation5 + $0x24] sm:$0xf]
    %v83 = vld [vmem:[#allocation5 + $0x28] sm:$0xf]
    %v84 = vld [vmem:[#allocation5 + $0x2c] sm:$0xf]
    %v85 = vld [vmem:[#allocation5 + $0x30] sm:$0xf]
    %v86 = vld [vmem:[#allocation5 + $0x34] sm:$0xf]
    %v87 = vld [vmem:[#allocation5 + $0x38] sm:$0xf]
    %v88 = vld [vmem:[#allocation5 + $0x3c] sm:$0xf]
    %v89 = vld [vmem:[#allocation5 + $0x40] sm:$0xf]
    %v90 = vld [vmem:[#allocation5 + $0x44] sm:$0xf]
    %v91 = vld [vmem:[#allocation5 + $0x48] sm:$0xf]
    %v92 = vld [vmem:[#allocation5 + $0x4c] sm:$0xf]
    %v93 = vld [vmem:[#allocation5 + $0x50] sm:$0xf]
    %v94 = vld [vmem:[#allocation5 + $0x54] sm:$0xf]
    %v95 = vld [vmem:[#allocation5 + $0x58] sm:$0xf]
    %v96 = vld [vmem:[#allocation5 + $0x5c] sm:$0xf]
    %v97 = vld [vmem:[#allocation5 + $0x60] sm:$0xf]
    %v98 = vld [vmem:[#allocation5 + $0x64] sm:$0xf]
    %v99 = vld [vmem:[#allocation5 + $0x68] sm:$0xf]
    %v100 = vld [vmem:[#allocation5 + $0x6c] sm:$0xf]
    %v101 = vld [vmem:[#allocation5 + $0x70] sm:$0xf]
    %v102 = vld [vmem:[#allocation5 + $0x74] sm:$0xf]
    %v103 = vld [vmem:[#allocation5 + $0x78] sm:$0xf]
    %v104 = vld [vmem:[#allocation5 + $0x7c] sm:$0xf]
    %v105 = vld [vmem:[#allocation5 + $0x80] sm:$0xf]
    %v106 = vld [vmem:[#allocation5 + $0x84] sm:$0xf]
    %v107 = vld [vmem:[#allocation5 + $0x88] sm:$0xf]
    %v108 = vld [vmem:[#allocation5 + $0x8c] sm:$0xf]
    %v109 = vld [vmem:[#allocation5 + $0x90] sm:$0xf]
    %v110 = vld [vmem:[#allocation5 + $0x94] sm:$0xf]
    %v111 = vld [vmem:[#allocation5 + $0x98] sm:$0xf]
    %v112 = vld [vmem:[#allocation5 + $0x9c] sm:$0xf]
    %v113 = vld [vmem:[#allocation5 + $0xa0] sm:$0xf]
    %v114 = vld [vmem:[#allocation5 + $0xa4] sm:$0xf]
    %v115 = vld [vmem:[#allocation5 + $0xa8] sm:$0xf]
    %v116 = vld [vmem:[#allocation5 + $0xac] sm:$0xf]
    %v117 = vld [vmem:[#allocation5 + $0xb0] sm:$0xf]
    %v118 = vld [vmem:[#allocation5 + $0xb4] sm:$0xf]
    %v119 = vld [vmem:[#allocation5 + $0xb8] sm:$0xf]
    %v120 = vld [vmem:[#allocation5 + $0xbc] sm:$0xf]
    %v121 = vld [vmem:[#allocation5 + $0xc0] sm:$0xf]
    %v122 = vld [vmem:[#allocation5 + $0xc4] sm:$0xf]
    %v123 = vld [vmem:[#allocation5 + $0xc8] sm:$0xf]
    %v124 = vld [vmem:[#allocation5 + $0xcc] sm:$0xf]
    %v125 = vld [vmem:[#allocation5 + $0xd0] sm:$0xf]
    %v126 = vld [vmem:[#allocation5 + $0xd4] sm:$0xf]
    %v127 = vld [vmem:[#allocation5 + $0xd8] sm:$0xf]
    %v128 = vld [vmem:[#allocation5 + $0xdc] sm:$0xf]
    %v129 = vld [vmem:[#allocation5 + $0xe0] sm:$0xf]
    %v130 = vld [vmem:[#allocation5 + $0xe4] sm:$0xf]
    %v131 = vld [vmem:[#allocation5 + $0xe8] sm:$0xf]
    %v132 = vld [vmem:[#allocation5 + $0xec] sm:$0xf]
    %v133 = vld [vmem:[#allocation5 + $0xf0] sm:$0xf]
    %v134 = vld [vmem:[#allocation5 + $0xf4] sm:$0xf]
    %v135 = vld [vmem:[#allocation5 + $0xf8] sm:$0xf]
    %v136 = vld [vmem:[#allocation5 + $0xfc] sm:$0xf]
    %v137 = vld [vmem:[#allocation5 + $0x100] sm:$0xf]
    %v138 = vld [vmem:[#allocation5 + $0x104] sm:$0xf]
    %v139 = vld [vmem:[#allocation5 + $0x108] sm:$0xf]
    %v140 = vld [vmem:[#allocation5 + $0x10c] sm:$0xf]
    %v141 = vld [vmem:[#allocation5 + $0x110] sm:$0xf]
    %v142 = vld [vmem:[#allocation5 + $0x114] sm:$0xf]
    %v143 = vld [vmem:[#allocation5 + $0x118] sm:$0xf]
    %v144 = vld [vmem:[#allocation5 + $0x11c] sm:$0xf]
    %v145 = vld [vmem:[#allocation5 + $0x120] sm:$0xf]
    %v146 = vld [vmem:[#allocation5 + $0x124] sm:$0xf]
    %v147 = vld [vmem:[#allocation5 + $0x128] sm:$0xf]
    %v148 = vld [vmem:[#allocation5 + $0x12c] sm:$0xf]
    %v149 = vld [vmem:[#allocation5 + $0x130] sm:$0xf]
    %v150 = vld [vmem:[#allocation5 + $0x134] sm:$0xf]
    %v151 = vld [vmem:[#allocation5 + $0x138] sm:$0xf]
    %v152 = vld [vmem:[#allocation5 + $0x13c] sm:$0xf]
    %v153 = vld [vmem:[#allocation5 + $0x140] sm:$0xf]
    %v154 = vld [vmem:[#allocation5 + $0x144] sm:$0xf]
    %v155 = vld [vmem:[#allocation5 + $0x148] sm:$0xf]
    %v156 = vld [vmem:[#allocation5 + $0x14c] sm:$0xf]
    %v157 = vld [vmem:[#allocation5 + $0x150] sm:$0xf]
    %v158 = vld [vmem:[#allocation5 + $0x154] sm:$0xf]
    %v159 = vld [vmem:[#allocation5 + $0x158] sm:$0xf]
    %v160 = vld [vmem:[#allocation5 + $0x15c] sm:$0xf]
    %v161 = vld [vmem:[#allocation5 + $0x160] sm:$0xf]
    %v162 = vld [vmem:[#allocation5 + $0x164] sm:$0xf]
    %v163 = vld [vmem:[#allocation5 + $0x168] sm:$0xf]
    %v164 = vld [vmem:[#allocation5 + $0x16c] sm:$0xf]
    %v165 = vld [vmem:[#allocation5 + $0x170] sm:$0xf]
    %v166 = vld [vmem:[#allocation5 + $0x174] sm:$0xf]
    %v167 = vld [vmem:[#allocation5 + $0x178] sm:$0xf]
    %v168 = vld [vmem:[#allocation5 + $0x17c] sm:$0xf]
    %v169 = vld [vmem:[%s2] sm:$0x1]
    %v171 = vlaneseq
    %v172 = vshrl.u32 %v171, 7
    %v173 = vsub.s32 0, %v172
    %v174 = vrot.slane %v169, %v173
    %v272 = vunpack.c.l.b16 %v73
    %v273 = vunpack.c.l.b16 %v74
    %v274 = vunpack.c.l.b16 %v75
    %v275 = vunpack.c.l.b16 %v76
    %v276 = vunpack.c.l.b16 %v77
    %v277 = vunpack.c.l.b16 %v78
    %v278 = vunpack.c.l.b16 %v79
    %v279 = vunpack.c.l.b16 %v80
    %v280 = vunpack.c.l.b16 %v81
    %v281 = vunpack.c.l.b16 %v82
    %v282 = vunpack.c.l.b16 %v83
    %v283 = vunpack.c.l.b16 %v84
    %v284 = vunpack.c.l.b16 %v85
    %v285 = vunpack.c.l.b16 %v86
    %v286 = vunpack.c.l.b16 %v87
    %v287 = vunpack.c.l.b16 %v88
    %v288 = vunpack.c.l.b16 %v89
    %v289 = vunpack.c.l.b16 %v90
    %v290 = vunpack.c.l.b16 %v91
    %v291 = vunpack.c.l.b16 %v92
    %v292 = vunpack.c.l.b16 %v93
    %v293 = vunpack.c.l.b16 %v94
    %v294 = vunpack.c.l.b16 %v95
    %v295 = vunpack.c.l.b16 %v96
    %v296 = vunpack.c.l.b16 %v97
    %v297 = vunpack.c.l.b16 %v98
    %v298 = vunpack.c.l.b16 %v99
    %v299 = vunpack.c.l.b16 %v100
    %v300 = vunpack.c.l.b16 %v101
    %v301 = vunpack.c.l.b16 %v102
    %v302 = vunpack.c.l.b16 %v103
    %v303 = vunpack.c.l.b16 %v104
    %v304 = vunpack.c.l.b16 %v105
    %v305 = vunpack.c.l.b16 %v106
    %v306 = vunpack.c.l.b16 %v107
    %v307 = vunpack.c.l.b16 %v108
    %v308 = vunpack.c.l.b16 %v109
    %v309 = vunpack.c.l.b16 %v110
    %v310 = vunpack.c.l.b16 %v111
    %v311 = vunpack.c.l.b16 %v112
    %v312 = vunpack.c.l.b16 %v113
    %v313 = vunpack.c.l.b16 %v114
    %v314 = vunpack.c.l.b16 %v115
    %v315 = vunpack.c.l.b16 %v116
    %v316 = vunpack.c.l.b16 %v117
    %v317 = vunpack.c.l.b16 %v118
    %v318 = vunpack.c.l.b16 %v119
    %v319 = vunpack.c.l.b16 %v120
    %v320 = vunpack.c.l.b16 %v121
    %v321 = vunpack.c.l.b16 %v122
    %v322 = vunpack.c.l.b16 %v123
    %v323 = vunpack.c.l.b16 %v124
    %v324 = vunpack.c.l.b16 %v125
    %v325 = vunpack.c.l.b16 %v126
    %v326 = vunpack.c.l.b16 %v127
    %v327 = vunpack.c.l.b16 %v128
    %v328 = vunpack.c.l.b16 %v129
    %v329 = vunpack.c.l.b16 %v130
    %v330 = vunpack.c.l.b16 %v131
    %v331 = vunpack.c.l.b16 %v132
    %v332 = vunpack.c.l.b16 %v133
    %v333 = vunpack.c.l.b16 %v134
    %v334 = vunpack.c.l.b16 %v135
    %v335 = vunpack.c.l.b16 %v136
    %v336 = vunpack.c.l.b16 %v137
    %v337 = vunpack.c.l.b16 %v138
    %v338 = vunpack.c.l.b16 %v139
    %v339 = vunpack.c.l.b16 %v140
    %v340 = vunpack.c.l.b16 %v141
    %v341 = vunpack.c.l.b16 %v142
    %v342 = vunpack.c.l.b16 %v143
    %v343 = vunpack.c.l.b16 %v144
    %v344 = vunpack.c.l.b16 %v145
    %v345 = vunpack.c.l.b16 %v146
    %v346 = vunpack.c.l.b16 %v147
    %v347 = vunpack.c.l.b16 %v148
    %v348 = vunpack.c.l.b16 %v149
    %v349 = vunpack.c.l.b16 %v150
    %v350 = vunpack.c.l.b16 %v151
    %v351 = vunpack.c.l.b16 %v152
    %v352 = vunpack.c.l.b16 %v153
    %v353 = vunpack.c.l.b16 %v154
    %v354 = vunpack.c.l.b16 %v155
    %v355 = vunpack.c.l.b16 %v156
    %v356 = vunpack.c.l.b16 %v157
    %v357 = vunpack.c.l.b16 %v158
    %v358 = vunpack.c.l.b16 %v159
    %v359 = vunpack.c.l.b16 %v160
    %v360 = vunpack.c.l.b16 %v161
    %v361 = vunpack.c.l.b16 %v162
    %v362 = vunpack.c.l.b16 %v163
    %v363 = vunpack.c.l.b16 %v164
    %v364 = vunpack.c.l.b16 %v165
    %v365 = vunpack.c.l.b16 %v166
    %v366 = vunpack.c.l.b16 %v167
    %v367 = vunpack.c.l.b16 %v168
    %v368 = vpack.c.b16 %v273, %v272
    %v369 = vpack.c.b16 %v275, %v274
    %v370 = vpack.c.b16 %v277, %v276
    %v371 = vpack.c.b16 %v279, %v278
    %v372 = vpack.c.b16 %v281, %v280
    %v373 = vpack.c.b16 %v283, %v282
    %v374 = vpack.c.b16 %v285, %v284
    %v375 = vpack.c.b16 %v287, %v286
    %v376 = vpack.c.b16 %v289, %v288
    %v377 = vpack.c.b16 %v291, %v290
    %v378 = vpack.c.b16 %v293, %v292
    %v379 = vpack.c.b16 %v295, %v294
    %v380 = vpack.c.b16 %v297, %v296
    %v381 = vpack.c.b16 %v299, %v298
    %v382 = vpack.c.b16 %v301, %v300
    %v383 = vpack.c.b16 %v303, %v302
    %v384 = vpack.c.b16 %v305, %v304
    %v385 = vpack.c.b16 %v307, %v306
    %v386 = vpack.c.b16 %v309, %v308
    %v387 = vpack.c.b16 %v311, %v310
    %v388 = vpack.c.b16 %v313, %v312
    %v389 = vpack.c.b16 %v315, %v314
    %v390 = vpack.c.b16 %v317, %v316
    %v391 = vpack.c.b16 %v319, %v318
    %v392 = vpack.c.b16 %v321, %v320
    %v393 = vpack.c.b16 %v323, %v322
    %v394 = vpack.c.b16 %v325, %v324
    %v395 = vpack.c.b16 %v327, %v326
    %v396 = vpack.c.b16 %v329, %v328
    %v397 = vpack.c.b16 %v331, %v330
    %v398 = vpack.c.b16 %v333, %v332
    %v399 = vpack.c.b16 %v335, %v334
    %v400 = vpack.c.b16 %v337, %v336
    %v401 = vpack.c.b16 %v339, %v338
    %v402 = vpack.c.b16 %v341, %v340
    %v403 = vpack.c.b16 %v343, %v342
    %v404 = vpack.c.b16 %v345, %v344
    %v405 = vpack.c.b16 %v347, %v346
    %v406 = vpack.c.b16 %v349, %v348
    %v407 = vpack.c.b16 %v351, %v350
    %v408 = vpack.c.b16 %v353, %v352
    %v409 = vpack.c.b16 %v355, %v354
    %v410 = vpack.c.b16 %v357, %v356
    %v411 = vpack.c.b16 %v359, %v358
    %v412 = vpack.c.b16 %v361, %v360
    %v413 = vpack.c.b16 %v363, %v362
    %v414 = vpack.c.b16 %v365, %v364
    %v415 = vpack.c.b16 %v367, %v366
    %464 = vmatprep.subr.bf16.mxu0 0
    %465 = vmatpush1.bf16.msra.mxu0 %v368
    %466 = vmatprep.subr.bf16.mxu0 0
    %467 = vmatpush1.bf16.msra.mxu0 %v369
    %468 = vmatprep.subr.bf16.mxu0 0
    %469 = vmatpush1.bf16.msra.mxu0 %v370
    %470 = vmatprep.subr.bf16.mxu0 0
    %471 = vmatpush1.bf16.msra.mxu0 %v371
    %472 = vmatprep.subr.bf16.mxu0 0
    %473 = vmatpush1.bf16.msra.mxu0 %v372
    %474 = vmatprep.subr.bf16.mxu0 0
    %475 = vmatpush1.bf16.msra.mxu0 %v373
    %476 = vmatprep.subr.bf16.mxu0 0
    %477 = vmatpush1.bf16.msra.mxu0 %v374
    %478 = vmatprep.subr.bf16.mxu0 0
    %479 = vmatpush1.bf16.msra.mxu0 %v375
    %480 = vmatprep.subr.bf16.mxu0 0
    %481 = vmatpush1.bf16.msra.mxu0 %v376
    %482 = vmatprep.subr.bf16.mxu0 0
    %483 = vmatpush1.bf16.msra.mxu0 %v377
    %484 = vmatprep.subr.bf16.mxu0 0
    %485 = vmatpush1.bf16.msra.mxu0 %v378
    %486 = vmatprep.subr.bf16.mxu0 0
    %487 = vmatpush1.bf16.msra.mxu0 %v379
    %488 = vmatprep.subr.bf16.mxu0 0
    %489 = vmatpush1.bf16.msra.mxu0 %v380
    %490 = vmatprep.subr.bf16.mxu0 0
    %491 = vmatpush1.bf16.msra.mxu0 %v381
    %492 = vmatprep.subr.bf16.mxu0 0
    %493 = vmatpush1.bf16.msra.mxu0 %v382
    %494 = vmatprep.subr.bf16.mxu0 0
    %495 = vmatpush1.bf16.msra.mxu0 %v383
    %496 = vmatprep.mubr.bf16.mxu0 %v68
    %497 = vmatmul.mubr.bf16.gmra.mrb[0].mxu0 %v67
    %v498 = vpop.f32.mrb[0].mxu0
    %v499 = vadd.f32 %v174, %v498
    %v500 = vpop.f32.mrb[0].mxu0
    %v501 = vpop.f32.mrb[0].mxu0
    %v502 = vpop.f32.mrb[0].mxu0
    %503 = vdwg.mxu0
    %504 = vmatprep.subr.bf16.mxu0 0
    %505 = vmatpush1.bf16.msra.mxu0 %v384
    %506 = vmatprep.subr.bf16.mxu0 0
    %507 = vmatpush1.bf16.msra.mxu0 %v385
    %508 = vmatprep.subr.bf16.mxu0 0
    %509 = vmatpush1.bf16.msra.mxu0 %v386
    %510 = vmatprep.subr.bf16.mxu0 0
    %511 = vmatpush1.bf16.msra.mxu0 %v387
    %512 = vmatprep.subr.bf16.mxu0 0
    %513 = vmatpush1.bf16.msra.mxu0 %v388
    %514 = vmatprep.subr.bf16.mxu0 0
    %515 = vmatpush1.bf16.msra.mxu0 %v389
    %516 = vmatprep.subr.bf16.mxu0 0
    %517 = vmatpush1.bf16.msra.mxu0 %v390
    %518 = vmatprep.subr.bf16.mxu0 0
    %519 = vmatpush1.bf16.msra.mxu0 %v391
    %520 = vmatprep.subr.bf16.mxu0 0
    %521 = vmatpush1.bf16.msra.mxu0 %v392
    %522 = vmatprep.subr.bf16.mxu0 0
    %523 = vmatpush1.bf16.msra.mxu0 %v393
    %524 = vmatprep.subr.bf16.mxu0 0
    %525 = vmatpush1.bf16.msra.mxu0 %v394
    %526 = vmatprep.subr.bf16.mxu0 0
    %527 = vmatpush1.bf16.msra.mxu0 %v395
    %528 = vmatprep.subr.bf16.mxu0 0
    %529 = vmatpush1.bf16.msra.mxu0 %v396
    %530 = vmatprep.subr.bf16.mxu0 0
    %531 = vmatpush1.bf16.msra.mxu0 %v397
    %532 = vmatprep.subr.bf16.mxu0 0
    %533 = vmatpush1.bf16.msra.mxu0 %v398
    %534 = vmatprep.subr.bf16.mxu0 0
    %535 = vmatpush1.bf16.msra.mxu0 %v399
    %536 = vmatprep.mubr.bf16.mxu0 %v70
    %537 = vmatmul.mubr.bf16.gmra.mrb[0].mxu0 %v69
    %v538 = vpop.f32.mrb[0].mxu0
    %v539 = vadd.f32 %v499, %v538
    %v540 = vpop.f32.mrb[0].mxu0
    %v541 = vpop.f32.mrb[0].mxu0
    %v542 = vpop.f32.mrb[0].mxu0
    %543 = vdwg.mxu0
    %544 = vmatprep.subr.bf16.mxu0 0
    %545 = vmatpush1.bf16.msra.mxu0 %v400
    %546 = vmatprep.subr.bf16.mxu0 0
    %547 = vmatpush1.bf16.msra.mxu0 %v401
    %548 = vmatprep.subr.bf16.mxu0 0
    %549 = vmatpush1.bf16.msra.mxu0 %v402
    %550 = vmatprep.subr.bf16.mxu0 0
    %551 = vmatpush1.bf16.msra.mxu0 %v403
    %552 = vmatprep.subr.bf16.mxu0 0
    %553 = vmatpush1.bf16.msra.mxu0 %v404
    %554 = vmatprep.subr.bf16.mxu0 0
    %555 = vmatpush1.bf16.msra.mxu0 %v405
    %556 = vmatprep.subr.bf16.mxu0 0
    %557 = vmatpush1.bf16.msra.mxu0 %v406
    %558 = vmatprep.subr.bf16.mxu0 0
    %559 = vmatpush1.bf16.msra.mxu0 %v407
    %560 = vmatprep.subr.bf16.mxu0 0
    %561 = vmatpush1.bf16.msra.mxu0 %v408
    %562 = vmatprep.subr.bf16.mxu0 0
    %563 = vmatpush1.bf16.msra.mxu0 %v409
    %564 = vmatprep.subr.bf16.mxu0 0
    %565 = vmatpush1.bf16.msra.mxu0 %v410
    %566 = vmatprep.subr.bf16.mxu0 0
    %567 = vmatpush1.bf16.msra.mxu0 %v411
    %568 = vmatprep.subr.bf16.mxu0 0
    %569 = vmatpush1.bf16.msra.mxu0 %v412
    %570 = vmatprep.subr.bf16.mxu0 0
    %571 = vmatpush1.bf16.msra.mxu0 %v413
    %572 = vmatprep.subr.bf16.mxu0 0
    %573 = vmatpush1.bf16.msra.mxu0 %v414
    %574 = vmatprep.subr.bf16.mxu0 0
    %575 = vmatpush1.bf16.msra.mxu0 %v415
    %576 = vmatprep.mubr.bf16.mxu0 %v72
    %577 = vmatmul.mubr.bf16.gmra.mrb[0].mxu0 %v71
    %v578 = vpop.f32.mrb[0].mxu0
    %v579 = vadd.f32 %v539, %v578
    %v580 = vpop.f32.mrb[0].mxu0
    %v581 = vpop.f32.mrb[0].mxu0
    %v582 = vpop.f32.mrb[0].mxu0
    %583 = vdwg.mxu0
    %v584 = vmax.f32 %v579, 0.0
    %v585 = vpack.c.bf16 %v584, %v584
    %v586 = vld [vmem:[#allocation7] sm:$0xf]
    %v587 = vld [vmem:[#allocation7 + $0x4] sm:$0xf]
    %v588 = vld [vmem:[#allocation7 + $0x8] sm:$0xf]
    %v589 = vld [vmem:[#allocation7 + $0xc] sm:$0xf]
    %v590 = vld [vmem:[#allocation7 + $0x10] sm:$0xf]
    %v591 = vld [vmem:[#allocation7 + $0x14] sm:$0xf]
    %v592 = vld [vmem:[#allocation7 + $0x18] sm:$0xf]
    %v593 = vld [vmem:[#allocation7 + $0x1c] sm:$0xf]
    %v594 = vld [vmem:[#allocation7 + $0x20] sm:$0xf]
    %v595 = vld [vmem:[#allocation7 + $0x24] sm:$0xf]
    %v596 = vld [vmem:[#allocation7 + $0x28] sm:$0xf]
    %v597 = vld [vmem:[#allocation7 + $0x2c] sm:$0xf]
    %v598 = vld [vmem:[#allocation7 + $0x30] sm:$0xf]
    %v599 = vld [vmem:[#allocation7 + $0x34] sm:$0xf]
    %v600 = vld [vmem:[#allocation7 + $0x38] sm:$0xf]
    %v601 = vld [vmem:[#allocation7 + $0x3c] sm:$0xf]
    %v602 = vld [vmem:[%s4] sm:$0x1]
    %v604 = vlaneseq
    %v605 = vshrl.u32 %v604, 7
    %v606 = vsub.s32 0, %v605
    %v607 = vrot.slane %v602, %v606
    %v625 = vunpack.c.l.b16 %v586
    %v626 = vunpack.c.l.b16 %v587
    %v627 = vunpack.c.l.b16 %v588
    %v628 = vunpack.c.l.b16 %v589
    %v629 = vunpack.c.l.b16 %v590
    %v630 = vunpack.c.l.b16 %v591
    %v631 = vunpack.c.l.b16 %v592
    %v632 = vunpack.c.l.b16 %v593
    %v633 = vunpack.c.l.b16 %v594
    %v634 = vunpack.c.l.b16 %v595
    %v635 = vunpack.c.l.b16 %v596
    %v636 = vunpack.c.l.b16 %v597
    %v637 = vunpack.c.l.b16 %v598
    %v638 = vunpack.c.l.b16 %v599
    %v639 = vunpack.c.l.b16 %v600
    %v640 = vunpack.c.l.b16 %v601
    %v641 = vpack.c.b16 %v626, %v625
    %v642 = vpack.c.b16 %v628, %v627
    %v643 = vpack.c.b16 %v630, %v629
    %v644 = vpack.c.b16 %v632, %v631
    %v645 = vpack.c.b16 %v634, %v633
    %v646 = vpack.c.b16 %v636, %v635
    %v647 = vpack.c.b16 %v638, %v637
    %v648 = vpack.c.b16 %v640, %v639
    %657 = vmatprep.subr.bf16.mxu0 0
    %658 = vmatpush1.bf16.msra.mxu0 %v641
    %659 = vmatprep.subr.bf16.mxu0 0
    %660 = vmatpush1.bf16.msra.mxu0 %v642
    %661 = vmatprep.subr.bf16.mxu0 0
    %662 = vmatpush1.bf16.msra.mxu0 %v643
    %663 = vmatprep.subr.bf16.mxu0 0
    %664 = vmatpush1.bf16.msra.mxu0 %v644
    %665 = vmatprep.subr.bf16.mxu0 0
    %666 = vmatpush1.bf16.msra.mxu0 %v645
    %667 = vmatprep.subr.bf16.mxu0 0
    %668 = vmatpush1.bf16.msra.mxu0 %v646
    %669 = vmatprep.subr.bf16.mxu0 0
    %670 = vmatpush1.bf16.msra.mxu0 %v647
    %671 = vmatprep.subr.bf16.mxu0 0
    %672 = vmatpush1.bf16.msra.mxu0 %v648
    %673 = vmatprep.subr.bf16.mxu0 0
    %674 = vmatpush1.bf16.msra.mxu0 0
    %675 = vmatprep.subr.bf16.mxu0 0
    %676 = vmatpush1.bf16.msra.mxu0 0
    %677 = vmatprep.subr.bf16.mxu0 0
    %678 = vmatpush1.bf16.msra.mxu0 0
    %679 = vmatprep.subr.bf16.mxu0 0
    %680 = vmatpush1.bf16.msra.mxu0 0
    %681 = vmatprep.subr.bf16.mxu0 0
    %682 = vmatpush1.bf16.msra.mxu0 0
    %683 = vmatprep.subr.bf16.mxu0 0
    %684 = vmatpush1.bf16.msra.mxu0 0
    %685 = vmatprep.subr.bf16.mxu0 0
    %686 = vmatpush1.bf16.msra.mxu0 0
    %687 = vmatprep.subr.bf16.mxu0 0
    %688 = vmatpush1.bf16.msra.mxu0 0
    %689 = vmatprep.mubr.bf16.mxu0 0
    %690 = vmatmul.mubr.bf16.gmra.mrb[0].mxu0 %v585
    %v691 = vpop.f32.mrb[0].mxu0
    %v692 = vadd.f32 %v607, %v691
    %v693 = vpop.f32.mrb[0].mxu0
    %v694 = vpop.f32.mrb[0].mxu0
    %v695 = vpop.f32.mrb[0].mxu0
    %696 = vdwg.mxu0
    %697 = vst [vmem:[#allocation8] sm:$0xff] %v692
    // Predicated region
    $region34: #{tpu_custom_call.1} parent=1 // pred_check
      _
    $region35: #{tpu_custom_call.1} parent=1 // pred_check_branch
      %699 = sbr.rel (0) target = $region37
    $region36: #{tpu_custom_call.1} parent=1 // pred_region
      %s701 = ssub.s32 128, 128
      %702 = vsyncadd [#allocation4], %s701
      %s704 = sshll.u32 [#allocation8], 4
      %s705 = int_to_ptr.vmem [resolvable:$true] %s704
      %707 = dma.vmem_to_hbm [thread:$0]  %s705, 128, %s5, [#allocation4]
    $region37: #{tpu_custom_call.1} parent=1 // pred_fallthru
      _
    // Predicated region
    $region38: #{tpu_custom_call.1} parent=1 // pred_check
      _
    $region39: #{tpu_custom_call.1} parent=1 // pred_check_branch
      %709 = sbr.rel (0) target = $region41
    $region40: #{tpu_custom_call.1} parent=1 // pred_region
      %710 = dma.done [#allocation4], 128
    $region41: #{tpu_custom_call.1} parent=1 // pred_fallthru
      _
    %711 = vsyncpa [#allocation3], 1
    %712 = vsyncpa [#allocation6], 1
    %713 = vsyncpa [#allocation4], 1

</llo_original>
